<compile_context>
chip_gen: v7x
topology: tpu7x:2x2x1
jax: 0.10.0
libtpu: 0.0.40
codegen_flags: <defaults>
</compile_context>

<pallas_src>
import functools

import jax
import jax.numpy as jnp
from jax.experimental import pallas as pl
from jax.experimental.pallas import tpu as pltpu


# ---------------- Phase 1: 1x1 conv on the low-resolution x ----------------
def _conv1x1_kernel(x_ref, w_ref, o_ref):
    # x_ref: (C_in, ts)  channels x flat-spatial tile (NCHW view, per batch)
    # w_ref: (K, C_in)
    # o_ref: (K, ts)
    o_ref[...] = jnp.dot(
        w_ref[...], x_ref[...], preferred_element_type=jnp.float32
    ).astype(o_ref.dtype)


# -------- Phase 2 (fast path): fused branch3 conv + nearest upsample + add --------
def _fused_decoder_kernel(low_ref, y1_ref, w3_ref, c_ref, o_ref, *, q, w, f, W):
    # low_ref: (c_low, TS)  flat-spatial tile, TS = q*f*W  (whole output rows)
    # y1_ref:  (K, q*w)     the q low-res source rows of conv1(x), flat
    # w3_ref:  (K, c_low)
    # c_ref:   (w, W)       one-hot nearest-neighbor column-upsample matrix
    # o_ref:   (K, TS)
    acc = jnp.dot(w3_ref[...], low_ref[...],
                  preferred_element_type=jnp.float32)            # (K, TS)
    y1_t = y1_ref[...]                                           # (K, q*w)
    c_m = c_ref[...]                                             # (w, W)
    for i in range(q):                      # static loop over source rows in tile
        rowc = jnp.dot(y1_t[:, i * w:(i + 1) * w], c_m,
                       preferred_element_type=jnp.float32)       # (K, W)
        for j in range(f):                  # nearest row repeat: f output rows / src row
            off = (i * f + j) * W
            o_ref[:, off:off + W] = (acc[:, off:off + W] + rowc).astype(o_ref.dtype)


# -------- Phase 2 (fallback): conv + add on a pre-upsampled y1 (general scales) ----
def _conv1x1_add_kernel(low_ref, y1u_ref, w3_ref, o_ref):
    # low_ref: (c_low, TS), y1u_ref: (K, TS), w3_ref: (K, c_low), o_ref: (K, TS)
    acc = jnp.dot(w3_ref[...], low_ref[...], preferred_element_type=jnp.float32)
    o_ref[...] = (acc + y1u_ref[...]).astype(o_ref.dtype)


# ------------------------------- tiling helpers ------------------------------------
def _pick_tile(total, target, align=128):
    """Largest divisor of `total` that is a multiple of `align` and <= target,
    else the full extent (keeps every BlockSpec (8,128)-legal)."""
    if total <= target:
        return total
    best = None
    t = align
    while t <= target:
        if total % t == 0:
            best = t
        t += align
    return best if best is not None else total


def _pick_q(h, w, f, W, target_ts):
    """Number of low-res source rows per fused-kernel tile.

    Constraints: q | h; output tile (q*f*W) and y1 tile (q*w) lane-widths are
    multiples of 128 or the full extent.  Prefers the largest tile <= target_ts.
    """
    s = h * w
    S = (h * f) * W
    best = None
    for q in range(1, h + 1):
        if h % q:
            continue
        ts = q * f * W
        yw = q * w
        ok = ((ts % 128 == 0) or (ts == S)) and ((yw % 128 == 0) or (yw == s))
        if not ok:
            continue
        if best is None or ts <= target_ts:
            best = q
        if ts >= target_ts:
            break
    return best if best is not None else h


# ------------------------------------ wrapper --------------------------------------
def decoder1_forward(low_level_feature, x, w1, w3, *,
                     ts_x_target=2048, ts_out_target=8192):
    """low_level_feature: (N, C_low, H, W) f32 NCHW
       x:                 (N, 128,   h, w) f32 NCHW
       w1: (K, 128)   conv1 weight (1x1 kernel squeezed)
       w3: (K, C_low) branch3 weight (1x1 kernel squeezed)
       returns: (N, K, H, W) f32 NCHW
    """
    N, c_low, H, W = low_level_feature.shape
    _, c_x, h, w = x.shape
    K = w1.shape[0]
    S = H * W
    s = h * w

    # ---- Phase 1: conv1 on the LOW-resolution x (1x1 conv commutes with nearest) ----
    x3 = x.reshape(N, c_x, s)                               # free view (stays NCHW)
    ts_x = _pick_tile(s, ts_x_target)
    y1 = pl.pallas_call(
        _conv1x1_kernel,
        out_shape=jax.ShapeDtypeStruct((N, K, s), jnp.float32),
        grid_spec=pltpu.PrefetchScalarGridSpec(
            num_scalar_prefetch=0,
            grid=(N, s // ts_x),
            in_specs=[
                pl.BlockSpec((None, c_x, ts_x), lambda n, t: (n, 0, t)),
                pl.BlockSpec((K, c_x), lambda n, t: (0, 0)),
            ],
            out_specs=pl.BlockSpec((None, K, ts_x), lambda n, t: (n, 0, t)),
        ),
        compiler_params=pltpu.CompilerParams(
            dimension_semantics=("parallel", "parallel")),
    )(x3, w1)

    low3 = low_level_feature.reshape(N, c_low, S)           # free view
    f = H // h

    if f >= 1 and f * h == H:
        # ---- Fast path: fully fused branch3 conv + nearest upsample + add ----
        # PyTorch 'nearest': src_col = floor(dst_col * w / W)  -> tiny one-hot matrix.
        col_src = (jnp.arange(W) * w) // W
        c_mat = (col_src[None, :] == jnp.arange(w)[:, None]).astype(jnp.float32)  # (w, W)

        q = _pick_q(h, w, f, W, ts_out_target)
        TS = q * f * W
        kern = functools.partial(_fused_decoder_kernel, q=q, w=w, f=f, W=W)
        out = pl.pallas_call(
            kern,
            out_shape=jax.ShapeDtypeStruct((N, K, S), jnp.float32),
            grid_spec=pltpu.PrefetchScalarGridSpec(
                num_scalar_prefetch=0,
                grid=(N, h // q),
                in_specs=[
                    pl.BlockSpec((None, c_low, TS), lambda n, t: (n, 0, t)),
                    pl.BlockSpec((None, K, q * w), lambda n, t: (n, 0, t)),
                    pl.BlockSpec((K, c_low), lambda n, t: (0, 0)),
                    pl.BlockSpec((w, W), lambda n, t: (0, 0)),
                ],
                out_specs=pl.BlockSpec((None, K, TS), lambda n, t: (n, 0, t)),
            ),
            compiler_params=pltpu.CompilerParams(
                dimension_semantics=("parallel", "parallel")),
        )(low3, y1, w3, c_mat)
    else:
        # ---- Fallback (non-integer row scale): upsample the tiny K-channel y1 via
        #      XLA gathers, then fuse branch3 conv + add in Pallas (previous path). ----
        # TODO(synk): cover non-integer row scales inside the fused kernel as well.
        row_idx = (jnp.arange(H) * h) // H
        col_idx = (jnp.arange(W) * w) // W
        y1_up = y1.reshape(N, K, h, w)[:, :, row_idx, :][:, :, :, col_idx]
        y1_up = y1_up.reshape(N, K, S)
        TS = _pick_tile(S, ts_out_target)
        out = pl.pallas_call(
            _conv1x1_add_kernel,
            out_shape=jax.ShapeDtypeStruct((N, K, S), jnp.float32),
            grid_spec=pltpu.PrefetchScalarGridSpec(
                num_scalar_prefetch=0,
                grid=(N, S // TS),
                in_specs=[
                    pl.BlockSpec((None, c_low, TS), lambda n, t: (n, 0, t)),
                    pl.BlockSpec((None, K, TS), lambda n, t: (n, 0, t)),
                    pl.BlockSpec((K, c_low), lambda n, t: (0, 0)),
                ],
                out_specs=pl.BlockSpec((None, K, TS), lambda n, t: (n, 0, t)),
            ),
            compiler_params=pltpu.CompilerParams(
                dimension_semantics=("parallel", "parallel")),
        )(low3, y1_up, w3)

    return out.reshape(N, K, H, W)                           # free view, already NCHW


def _reference(low_feat, x, w1, w3):
    """Pure-JAX reference matching the PyTorch forward."""
    H, W = low_feat.shape[2:]
    h, w = x.shape[2:]
    row_idx = (jnp.arange(H) * h) // H
    col_idx = (jnp.arange(W) * w) // W
    x_up = x[:, :, row_idx, :][:, :, :, col_idx]
    return (jnp.einsum("nchw,kc->nkhw", x_up, w1)
            + jnp.einsum("nchw,kc->nkhw", low_feat, w3))


if __name__ == "__main__":
    # Module-consistent small shapes: numClasses = 8, lowLevelInChannel = 4,
    # lowLevelFeature: (2, 4, 16, 16), x: (2, 128, 8, 8).
    num_classes = 8
    low_in_ch = 4

    key = jax.random.PRNGKey(0)
    k1, k2, k3, k4, k5 = jax.random.split(key, 5)
    low_feat = jax.random.normal(k1, (2, low_in_ch, 16, 16), dtype=jnp.float32)
    x = jax.random.normal(k2, (2, 128, 8, 8), dtype=jnp.float32)
    w1 = jax.random.normal(k3, (num_classes, 128), dtype=jnp.float32) * 0.05
    w3 = jax.random.normal(k4, (num_classes, low_in_ch), dtype=jnp.float32) * 0.05

    # Fast (fused) path: H = 2*h, W = 2*w.
    out = jax.block_until_ready(decoder1_forward(low_feat, x, w1, w3))
    ref = _reference(low_feat, x, w1, w3)
    assert out.shape == (2, num_classes, 16, 16)
    assert jnp.allclose(out, ref, atol=1e-4, rtol=1e-4)

    # Fallback path: non-integer row scale (H = 12 with h = 8).
    low_feat2 = jax.random.normal(k5, (2, low_in_ch, 12, 12), dtype=jnp.float32)
    out2 = jax.block_until_ready(decoder1_forward(low_feat2, x, w1, w3))
    ref2 = _reference(low_feat2, x, w1, w3)
    assert out2.shape == (2, num_classes, 12, 12)
    assert jnp.allclose(out2, ref2, atol=1e-4, rtol=1e-4)

    print("KERNEL_OK")
</pallas_src>

<mosaic_0001>
module attributes {stable_mosaic.version = 11 : i64} {
  func.func @_conv1x1_kernel(%arg0: i32, %arg1: i32, %arg2: memref<1x128x64xf32, #tpu.memory_space<vmem>>, %arg3: memref<8x128xf32, #tpu.memory_space<vmem>>, %arg4: memref<1x8x64xf32, #tpu.memory_space<vmem>>) attributes {dimension_semantics = [#tpu.dimension_semantics<parallel>, #tpu.dimension_semantics<parallel>], iteration_bounds = array<i64: 2, 1>, scalar_prefetch = 0 : i64, scratch_operands = 0 : i64, tpu.core_type = #tpu.core_type<tc>, window_params = [{transform_indices = @transform_0, window_bounds = array<i64: 1, 128, 64>}, {pipeline_mode = #tpu.pipeline_mode<synchronous>, transform_indices = @transform_1, window_bounds = array<i64: 8, 128>}, {transform_indices = @transform_2, window_bounds = array<i64: 1, 8, 64>}]} {
    %c0 = arith.constant 0 : index
    %c0_0 = arith.constant 0 : index
    %0 = vector.load %arg3[%c0, %c0_0] : memref<8x128xf32, #tpu.memory_space<vmem>>, vector<8x128xf32>
    %c0_1 = arith.constant 0 : index
    %c0_2 = arith.constant 0 : index
    %c0_3 = arith.constant 0 : index
    %1 = vector.load %arg2[%c0_1, %c0_2, %c0_3] : memref<1x128x64xf32, #tpu.memory_space<vmem>>, vector<1x128x64xf32>
    %2 = vector.shape_cast %1 : vector<1x128x64xf32> to vector<128x64xf32>
    %cst = arith.constant dense<0.000000e+00> : vector<8x64xf32>
    %3 = tpu.matmul %0, %2, %cst {dimension_numbers = #tpu.dot_dimension_numbers<[1], [0], [0], [1], [0, 0, 1, 1], [], []>} : vector<8x128xf32>, vector<128x64xf32>, vector<8x64xf32> -> vector<8x64xf32>
    %c0_4 = arith.constant 0 : index
    %c0_5 = arith.constant 0 : index
    %c0_6 = arith.constant 0 : index
    %4 = vector.load %arg4[%c0_4, %c0_5, %c0_6] : memref<1x8x64xf32, #tpu.memory_space<vmem>>, vector<1x8x64xf32>
    %5 = vector.shape_cast %4 : vector<1x8x64xf32> to vector<8x64xf32>
    %6 = vector.shape_cast %3 : vector<8x64xf32> to vector<1x8x64xf32>
    tpu.vector_store %arg4[%c0_4, %c0_5, %c0_6], %6 {strides = array<i32>} : memref<1x8x64xf32, #tpu.memory_space<vmem>>, vector<1x8x64xf32>,
    return
  }
  func.func @transform_0(%arg0: i32, %arg1: i32) -> (i32, i32, i32) {
    %c0_i32 = arith.constant 0 : i32
    %c0_i32_0 = arith.constant 0 : i32
    return %arg0, %c0_i32, %arg1 : i32, i32, i32
  }
  func.func @transform_1(%arg0: i32, %arg1: i32) -> (i32, i32) {
    %c0_i32 = arith.constant 0 : i32
    %c0_i32_0 = arith.constant 0 : i32
    %c0_i32_1 = arith.constant 0 : i32
    return %c0_i32, %c0_i32_0 : i32, i32
  }
  func.func @transform_2(%arg0: i32, %arg1: i32) -> (i32, i32, i32) {
    %c0_i32 = arith.constant 0 : i32
    %c0_i32_0 = arith.constant 0 : i32
    return %arg0, %c0_i32, %arg1 : i32, i32, i32
  }
}

</mosaic_0001>

<llo_original>
// kernel: tpu_custom_call.1
$region0: #{tpu_custom_call.1}
  #allocation0 [shape = 'u32[]', space=smem, size = 0x4, offset = 0x4, fixed_abs, tag = 'smem constant byte address 0x4 - core index']
  #allocation1 [shape = 'u32[144,128]{1,0:T(1,128)}', space=vmem, size = 0x12000, scoped, tag = 'internal scratch']
  %s0 = inlined_call_operand.vmem [shape: f32[2,128,64], index: 0, kind: input, shape index: {}]
  %s1 = inlined_call_operand.vmem [shape: f32[8,128], index: 1, kind: input, shape index: {}]
  %s2 = inlined_call_operand.hbm [shape: f32[2,8,64], index: 2, kind: output, shape index: {}]
  %s3 = sld [smem:[#allocation0]]
  $region41: #{tpu_custom_call.1} parent=0
    _
  %s5 = ssub.s32 1, %s3
  %s6 = scalar_select 0, %s5, %s3
  $region1: #{tpu_custom_call.1} parent=0
    #allocation2 [shape = 'u8[8192]{0}', space=vmem, size = 0x2000, scoped, tag = 'output window, operand 0']
    #allocation3 [shape = 's32[2]{0}', space=sflag, size = 0x8, scoped, tag = 'scoped memory for tpu_custom_call.1']
    %7 = vsyncpa [#allocation3], 0
    %s8 = scalar_lea.sflag [#allocation3], 1
    %9 = vsyncpa %s8, 0
    loop: start=0, step=1, limit=4
    $region2: #{tpu_custom_call.1} parent=1 // loop_pre_header
      _
    $region3: #{tpu_custom_call.1} parent=1 // loop_header
      %s11 = sphi 0, %s15
      %p12 = scmp.ge.s32.totalorder %s11, 4
      %s18 = sphi 0, %s30
      %s19 = sphi 0, %s26
      %s20 = sphi 0, %s18
      %s21 = sphi 0, %s19
      %s22 = sphi 0, %s20
      %s23 = sphi 0, %s21
      %s35 = sphi 0, %s37
      %s38 = sphi 0, %s35
      %s39 = sphi 0, %s38
      %s55 = sphi 0, %s39
      %s59 = sphi 0, %s59
      %s61 = sphi 0, %s59
      %s62 = sphi 0, %s61
      %s76 = sphi 0, %s62
      %s84 = sphi 0, %s86
      %s87 = sphi 0, %s84
      %s88 = sphi 0, %s87
      %s104 = sphi 0, %s88
    $region4: #{tpu_custom_call.1} parent=1 // loop_header_branch
      %14 = sbr.rel (%p12) target = $region8
    $region5: #{tpu_custom_call.1} parent=1 // loop_body
      %s16 = ssub.s32 %s11, 1
      %s17 = ssub.s32 %s11, 2
      %s24 = sadd.s32 1, %s19
      %p25 = scmp.ge.s32.totalorder %s24, 1
      %s26 = scalar_select %p25, 0, %s24
      %s27 = sadd.s32 1, %s18
      %s28 = scalar_select %p25, %s27, %s18
      %p29 = scmp.ge.s32.totalorder %s28, 2
      %s30 = scalar_select %p29, 0, %s28
      %s31 = ssub.s32 %s18, %s30
      %s32 = ssub.s32 %s19, %s26
      %s33 = sor.u32 %s31, %s32
      %p34 = scmp.eq.s32.totalorder %s33, 0
      %s36 = sadd.s32 %s35, 1
      %s37 = scalar_select %p34, %s35, %s36
      %p40 = pneg %p34
      %p41 = scmp.eq.s32.totalorder %s11, 1
      %p42 = por %p40, %p41
      %p43 = scmp.ne.s32.totalorder %s35, %s38
      %p44 = scmp.eq.s32.totalorder %s11, 0
      %p45 = por %p43, %p44
      %p46 = scmp.ne.s32.totalorder %s35, %s38
      %p47 = scmp.eq.s32.totalorder %s16, 1
      %p48 = por %p46, %p47
      %p49 = scmp.ne.s32.totalorder %s38, %s39
      %p50 = scmp.eq.s32.totalorder %s16, 0
      %p51 = por %p49, %p50
      %p52 = scmp.ne.s32.totalorder %s38, %s39
      %p53 = scmp.eq.s32.totalorder %s17, 1
      %p54 = por %p52, %p53
      %p56 = scmp.ne.s32.totalorder %s39, %s55
      %p57 = scmp.eq.s32.totalorder %s17, 0
      %p58 = por %p56, %p57
      %s60 = sadd.s32 %s59, 1
      %p63 = scmp.eq.s32.totalorder %s11, 1
      %p64 = scmp.ne.s32.totalorder %s59, %s61
      %p65 = scmp.eq.s32.totalorder %s11, 0
      %p66 = por %p64, %p65
      %p67 = scmp.ne.s32.totalorder %s59, %s61
      %p68 = scmp.eq.s32.totalorder %s16, 1
      %p69 = por %p67, %p68
      %p70 = scmp.ne.s32.totalorder %s61, %s62
      %p71 = scmp.eq.s32.totalorder %s16, 0
      %p72 = por %p70, %p71
      %p73 = scmp.ne.s32.totalorder %s61, %s62
      %p74 = scmp.eq.s32.totalorder %s17, 1
      %p75 = por %p73, %p74
      %p77 = scmp.ne.s32.totalorder %s62, %s76
      %p78 = scmp.eq.s32.totalorder %s17, 0
      %p79 = por %p77, %p78
      %s80 = ssub.s32 %s18, %s30
      %s81 = ssub.s32 %s19, %s26
      %s82 = sor.u32 %s80, %s81
      %p83 = scmp.eq.s32.totalorder %s82, 0
      %s85 = sadd.s32 %s84, 1
      %s86 = scalar_select %p83, %s84, %s85
      %p89 = pneg %p83
      %p90 = scmp.eq.s32.totalorder %s11, 1
      %p91 = por %p89, %p90
      %p92 = scmp.ne.s32.totalorder %s84, %s87
      %p93 = scmp.eq.s32.totalorder %s11, 0
      %p94 = por %p92, %p93
      %p95 = scmp.ne.s32.totalorder %s84, %s87
      %p96 = scmp.eq.s32.totalorder %s16, 1
      %p97 = por %p95, %p96
      %p98 = scmp.ne.s32.totalorder %s87, %s88
      %p99 = scmp.eq.s32.totalorder %s16, 0
      %p100 = por %p98, %p99
      %p101 = scmp.ne.s32.totalorder %s87, %s88
      %p102 = scmp.eq.s32.totalorder %s17, 1
      %p103 = por %p101, %p102
      %p105 = scmp.ne.s32.totalorder %s88, %s104
      %p106 = scmp.eq.s32.totalorder %s17, 0
      %p107 = por %p105, %p106
      %p108 = scmp.le.s32.totalorder 1, %s11
      %p109 = scmp.lt.s32.totalorder %s11, 3
      %p110 = pnand %p108, %p109
      %p111 = pneg %p110
      // Predicated region
      $region9: #{tpu_custom_call.1} parent=5 // pred_check
        _
      $region10: #{tpu_custom_call.1} parent=5 // pred_check_branch
        %113 = sbr.rel (%p110) target = $region12
      $region11: #{tpu_custom_call.1} parent=5 // pred_region
        %s114 = ssub.s32 %s11, 1
        // Predicated region
        $region13: #{tpu_custom_call.1} parent=11 // pred_check
          %p115 = pneg %p72
        $region14: #{tpu_custom_call.1} parent=11 // pred_check_branch
          %117 = sbr.rel (%p115) target = $region16
        $region15: #{tpu_custom_call.1} parent=11 // pred_region
          _
        $region16: #{tpu_custom_call.1} parent=11 // pred_fallthru
          _
      $region12: #{tpu_custom_call.1} parent=5 // pred_fallthru
        _
      %p118 = scmp.lt.s32.totalorder %s11, 2
      // Predicated region
      $region17: #{tpu_custom_call.1} parent=5 // pred_check
        %p119 = pneg %p118
      $region18: #{tpu_custom_call.1} parent=5 // pred_check_branch
        %121 = sbr.rel (%p119) target = $region20
      $region19: #{tpu_custom_call.1} parent=5 // pred_region
        // Predicated region
        $region21: #{tpu_custom_call.1} parent=19 // pred_check
          %p122 = pneg %p45
        $region22: #{tpu_custom_call.1} parent=19 // pred_check_branch
          %124 = sbr.rel (%p122) target = $region24
        $region23: #{tpu_custom_call.1} parent=19 // pred_region
          %p125 = scmp.lt.s32.totalorder %s18, 1
          %s126 = scalar_select %p125, %s18, 1
          %p127 = scmp.lt.s32.totalorder %s19, 0
          %s128 = scalar_select %p127, %s19, 0
          %s129 = smul.addr %s126, 16
          %s130 = sadd.s32 %s128, %s129
          %s131 = smul.addr %s130, 8
          %s132 = scalar_lea.vmem %s0, %s131
        $region24: #{tpu_custom_call.1} parent=19 // pred_fallthru
          _
      $region20: #{tpu_custom_call.1} parent=5 // pred_fallthru
        _
      %p133 = scmp.le.s32.totalorder 1, %s11
      %p134 = scmp.lt.s32.totalorder %s11, 3
      %p135 = pnand %p133, %p134
      %p136 = pneg %p135
      // Predicated region
      $region25: #{tpu_custom_call.1} parent=5 // pred_check
        _
      $region26: #{tpu_custom_call.1} parent=5 // pred_check_branch
        %138 = sbr.rel (%p135) target = $region28
      $region27: #{tpu_custom_call.1} parent=5 // pred_region
        %s139 = ssub.s32 %s11, 1
        %p140 = scmp.lt.s32.totalorder %s20, 1
        %s141 = scalar_select %p140, %s20, 1
        %p142 = scmp.lt.s32.totalorder %s21, 0
        %s143 = scalar_select %p142, %s21, 0
        %s144 = smul.addr %s141, 16
        %s145 = sadd.s32 %s143, %s144
        %s146 = smul.addr %s145, 8
        %s147 = scalar_lea.vmem %s0, %s146
        %p148 = pneg %p51
        %p149 = pneg %p48
        %p150 = pneg %p72
        %p151 = pneg %p69
        %p152 = pneg %p100
        %p153 = pneg %p97
        %s154 = sand.u32 %s87, 1
        %s155 = scalar_lea.sflag [#allocation3], %s154
        %s156 = sand.u32 %s87, 1
        %s157 = smul.addr %s156, 8
        %s158 = scalar_lea.vmem [#allocation2], %s157
        %p159 = scmp.lt.s32.totalorder %s20, 1
        %s160 = scalar_select %p159, %s20, 1
        %p161 = scmp.lt.s32.totalorder %s21, 0
        %s162 = scalar_select %p161, %s21, 0
        %s163 = smul.addr %s160, 16
        %s164 = sadd.s32 %s162, %s163
        %s165 = smul.addr %s164, 8
        %s166 = scalar_lea.vmem %s0, %s165
        %v167 = vld [vmem:[%s1] sm:$0xff]
        %v168 = vld [vmem:[%s166] sm:$0xff]
        %v169 = vld [vmem:[%s166 + $0x8] sm:$0xff]
        %v170 = vld [vmem:[%s166 + $0x10] sm:$0xff]
        %v171 = vld [vmem:[%s166 + $0x18] sm:$0xff]
        %v172 = vld [vmem:[%s166 + $0x20] sm:$0xff]
        %v173 = vld [vmem:[%s166 + $0x28] sm:$0xff]
        %v174 = vld [vmem:[%s166 + $0x30] sm:$0xff]
        %v175 = vld [vmem:[%s166 + $0x38] sm:$0xff]
        %v176 = vld [vmem:[%s166 + $0x40] sm:$0xff]
        %v177 = vld [vmem:[%s166 + $0x48] sm:$0xff]
        %v178 = vld [vmem:[%s166 + $0x50] sm:$0xff]
        %v179 = vld [vmem:[%s166 + $0x58] sm:$0xff]
        %v180 = vld [vmem:[%s166 + $0x60] sm:$0xff]
        %v181 = vld [vmem:[%s166 + $0x68] sm:$0xff]
        %v182 = vld [vmem:[%s166 + $0x70] sm:$0xff]
        %v183 = vld [vmem:[%s166 + $0x78] sm:$0xff]
        %184 = vmatprep.subr.mxu0 0.0
        %185 = vmatpush1.msra.mxu0 %v168
        %186 = vmatprep.subr.mxu0 0.0
        %187 = vmatpush1.msra.mxu0 %v169
        %188 = vmatprep.subr.mxu0 0.0
        %189 = vmatpush1.msra.mxu0 %v170
        %190 = vmatprep.subr.mxu0 0.0
        %191 = vmatpush1.msra.mxu0 %v171
        %192 = vmatprep.subr.mxu0 0.0
        %193 = vmatpush1.msra.mxu0 %v172
        %194 = vmatprep.subr.mxu0 0.0
        %195 = vmatpush1.msra.mxu0 %v173
        %196 = vmatprep.subr.mxu0 0.0
        %197 = vmatpush1.msra.mxu0 %v174
        %198 = vmatprep.subr.mxu0 0.0
        %199 = vmatpush1.msra.mxu0 %v175
        %200 = vmatprep.subr.mxu0 0.0
        %201 = vmatpush1.msra.mxu0 %v176
        %202 = vmatprep.subr.mxu0 0.0
        %203 = vmatpush1.msra.mxu0 %v177
        %204 = vmatprep.subr.mxu0 0.0
        %205 = vmatpush1.msra.mxu0 %v178
        %206 = vmatprep.subr.mxu0 0.0
        %207 = vmatpush1.msra.mxu0 %v179
        %208 = vmatprep.subr.mxu0 0.0
        %209 = vmatpush1.msra.mxu0 %v180
        %210 = vmatprep.subr.mxu0 0.0
        %211 = vmatpush1.msra.mxu0 %v181
        %212 = vmatprep.subr.mxu0 0.0
        %213 = vmatpush1.msra.mxu0 %v182
        %214 = vmatprep.subr.mxu0 0.0
        %215 = vmatpush1.msra.mxu0 %v183
        %216 = vmatprep.subr.mxu0 0.0
        %217 = vmatpush1.msra.mxu0 0.0
        %218 = vmatprep.subr.mxu0 0.0
        %219 = vmatpush1.msra.mxu0 0.0
        %220 = vmatprep.subr.mxu0 0.0
        %221 = vmatpush1.msra.mxu0 0.0
        %222 = vmatprep.subr.mxu0 0.0
        %223 = vmatpush1.msra.mxu0 0.0
        %224 = vmatprep.subr.mxu0 0.0
        %225 = vmatpush1.msra.mxu0 0.0
        %226 = vmatprep.subr.mxu0 0.0
        %227 = vmatpush1.msra.mxu0 0.0
        %228 = vmatprep.subr.mxu0 0.0
        %229 = vmatpush1.msra.mxu0 0.0
        %230 = vmatprep.subr.mxu0 0.0
        %231 = vmatpush1.msra.mxu0 0.0
        %232 = vmatprep.subr.mxu0 0.0
        %233 = vmatpush1.msra.mxu0 0.0
        %234 = vmatprep.subr.mxu0 0.0
        %235 = vmatpush1.msra.mxu0 0.0
        %236 = vmatprep.subr.mxu0 0.0
        %237 = vmatpush1.msra.mxu0 0.0
        %238 = vmatprep.subr.mxu0 0.0
        %239 = vmatpush1.msra.mxu0 0.0
        %240 = vmatprep.subr.mxu0 0.0
        %241 = vmatpush1.msra.mxu0 0.0
        %242 = vmatprep.subr.mxu0 0.0
        %243 = vmatpush1.msra.mxu0 0.0
        %244 = vmatprep.subr.mxu0 0.0
        %245 = vmatpush1.msra.mxu0 0.0
        %246 = vmatprep.subr.mxu0 0.0
        %247 = vmatpush1.msra.mxu0 0.0
        %248 = vmatprep.mubr.f32.mxu0 0.0
        %249 = vmatmul.mubr.f32.gmra.mrb[0].mxu0 %v167
        %v250 = vpop.f32.mrb[0].mxu0
        %v251 = vadd.f32 0.0, %v250
        %v252 = vpop.f32.mrb[0].mxu0
        %253 = vdwg.mxu0
        %vm254 = vcmask 523264
        %255 = vst.msk [vmem:[%s158] sm:$0xff] %vm254, %v251
        %s256 = sand.u32 %s87, 1
        %s257 = scalar_lea.sflag [#allocation3], %s256
        %s258 = sand.u32 %s87, 1
        %s259 = smul.addr %s258, 8
        %s260 = scalar_lea.vmem [#allocation2], %s259
        // Predicated region
        $region29: #{tpu_custom_call.1} parent=27 // pred_check
          %p261 = pneg %p97
        $region30: #{tpu_custom_call.1} parent=27 // pred_check_branch
          %263 = sbr.rel (%p261) target = $region32
        $region31: #{tpu_custom_call.1} parent=27 // pred_region
          %s265 = ssub.s32 128, 128
          %266 = vsyncadd %s257, %s265
          %s267 = sadd.s32 %s21, %s20
          %s268 = smul.addr %s267, 128
          %s269 = scalar_lea.hbm %s2, %s268
          %s271 = sshll.u32 %s260, 4
          %s272 = int_to_ptr.vmem [resolvable:$true] %s271
          %274 = dma.vmem_to_hbm [thread:$0]  %s272, 128, %s269, %s257
        $region32: #{tpu_custom_call.1} parent=27 // pred_fallthru
          _
      $region28: #{tpu_custom_call.1} parent=5 // pred_fallthru
        _
      %p275 = scmp.le.s32.totalorder 2, %s11
      // Predicated region
      $region33: #{tpu_custom_call.1} parent=5 // pred_check
        %p276 = pneg %p275
      $region34: #{tpu_custom_call.1} parent=5 // pred_check_branch
        %278 = sbr.rel (%p276) target = $region36
      $region35: #{tpu_custom_call.1} parent=5 // pred_region
        %s279 = ssub.s32 %s11, 2
        // Predicated region
        $region37: #{tpu_custom_call.1} parent=35 // pred_check
          %p280 = pneg %p103
        $region38: #{tpu_custom_call.1} parent=35 // pred_check_branch
          %282 = sbr.rel (%p280) target = $region40
        $region39: #{tpu_custom_call.1} parent=35 // pred_region
          %s283 = sand.u32 %s88, 1
          %s284 = scalar_lea.sflag [#allocation3], %s283
          %s285 = sand.u32 %s88, 1
          %s286 = smul.addr %s285, 8
          %s287 = scalar_lea.vmem [#allocation2], %s286
          %288 = dma.done %s284, 128
        $region40: #{tpu_custom_call.1} parent=35 // pred_fallthru
          _
      $region36: #{tpu_custom_call.1} parent=5 // pred_fallthru
        _
    $region6: #{tpu_custom_call.1} parent=1 // loop_footer
      %s15 = sadd.s32 1, %s11
    $region7: #{tpu_custom_call.1} parent=1 // loop_footer_branch
      %10 = sbr.rel target = $region3
    $region8: #{tpu_custom_call.1} parent=1 // loop_exit
      _
    %289 = vsyncpa [#allocation3], 1
    %s290 = scalar_lea.sflag [#allocation3], 1
    %291 = vsyncpa %s290, 1

</llo_original>
